<compile_context>
chip_gen: v5e
topology: v5e:2x2
jax: 0.10.0
libtpu: 0.0.40
codegen_flags: <defaults>
</compile_context>

<pallas_src>
import functools

import numpy as np
import jax
import jax.numpy as jnp
from jax import lax
from jax.experimental import pallas as pl
from jax.experimental.pallas import tpu as pltpu

H = W = 3
C_IN, C_MID, C_OUT = 64, 32, 16
K1 = C_IN * H * W            # 576  (conv1 input,  NCHW-flat)
K2 = C_MID * H * W           # 288  (conv1 output, NCHW-flat)
K3 = C_OUT * H * W           # 144  (conv2 output, NCHW-flat)
K2P = 384                    # 288 padded to 3*128 lanes
K3P = 256                    # 144 padded to 2*128 lanes


# ----------------------------------------------------------------------------
# One-time parameter reformatting (hoisted out of the per-call hot path)
# ----------------------------------------------------------------------------
def _build_selection_tensor():
    """Constant (ky,kx,hi,wi,ho,wo) 0/1 tensor describing a 3x3 'same' conv on a
    3x3 map: 1 iff hi == ho+ky-1 and wi == wo+kx-1 (both in bounds)."""
    s = np.zeros((3, 3, 3, 3, 3, 3), np.float32)
    for ky in range(3):
        for kx in range(3):
            for ho in range(3):
                hi = ho + ky - 1
                if not 0 <= hi < 3:
                    continue
                for wo in range(3):
                    wi = wo + kx - 1
                    if not 0 <= wi < 3:
                        continue
                    s[ky, kx, hi, wi, ho, wo] = 1.0
    return s


_SEL = _build_selection_tensor()   # numpy constant, folded at trace time


def _conv3x3_same_as_matrix(w):
    """PyTorch conv weight (Cout, Cin, 3, 3), stride 1, pad 1, applied to a 3x3
    map, as a dense matrix mapping NCHW-flat (Cin*9,) -> NCHW-flat (Cout*9,).
    Single einsum against a constant selection tensor (no scatters)."""
    cout, cin = w.shape[0], w.shape[1]
    m = jnp.einsum('oiyx,yxhwab->ihwoab', w, _SEL)   # (Cin,3,3,Cout,3,3)
    return m.reshape(cin * 9, cout * 9)


def prepare_finetuner_params(params, dtype=jnp.float32):
    """One-time reformatting of (w1,b1,w2,b2,wfc,bfc) into lane-padded matmul
    operands. Padded rows/columns are zero, so ReLU(0)=0 keeps the math exact.

    dtype=jnp.bfloat16 halves the weight/activation HBM stream and uses the
    native bf16 MXU rate, but changes rounding; kept f32 by default to hold the
    1e-4 reference tolerance.
    """
    w1, b1, w2, b2, wfc, bfc = params
    num_classes = wfc.shape[0]
    ncp = max(128, pl.cdiv(num_classes, 128) * 128)

    w1_m = jnp.pad(_conv3x3_same_as_matrix(w1), ((0, 0), (0, K2P - K2)))
    b1_m = jnp.pad(jnp.repeat(b1, H * W), (0, K2P - K2)).reshape(1, K2P)
    w2_m = jnp.pad(_conv3x3_same_as_matrix(w2), ((0, K2P - K2), (0, K3P - K3)))
    b2_m = jnp.pad(jnp.repeat(b2, H * W), (0, K3P - K3)).reshape(1, K3P)
    wfc_m = jnp.pad(wfc.T, ((0, K3P - K3), (0, ncp - num_classes)))
    bfc_m = jnp.pad(bfc, (0, ncp - num_classes)).reshape(1, ncp)

    return (w1_m.astype(dtype), b1_m.astype(jnp.float32),
            w2_m.astype(dtype), b2_m.astype(jnp.float32),
            wfc_m.astype(dtype), bfc_m.astype(jnp.float32))


# ----------------------------------------------------------------------------
# Fused kernel
# ----------------------------------------------------------------------------
def fused_finetuner_kernel(x_ref, w1_ref, b1_ref, w2_ref, b2_ref,
                           wfc_ref, bfc_ref, out_ref):
    """conv1+ReLU -> conv2+ReLU -> flatten -> fc for one (TB, ...) batch block.

    x_ref  : (TB, 576)   NCHW-flattened encoder features
    w1_ref : (576, 384)  conv1 unrolled to a dense (Toeplitz) matrix, lane-padded
    w2_ref : (384, 256)  conv2 unrolled, lane-padded (zero pad rows/cols)
    wfc_ref: (256, NCP)  fc weight, zero-padded rows + output lanes
    out_ref: (TB, NCP)   logits (lane-dense, padded columns are exactly zero)
    """
    # conv1 + ReLU   (Dropout(0.4) is identity in eval mode)
    h1 = jnp.maximum(
        jnp.dot(x_ref[...], w1_ref[...], preferred_element_type=jnp.float32)
        + b1_ref[...], 0.0)
    # conv2 + ReLU   (Dropout(0.4) is identity in eval mode)
    h2 = jnp.maximum(
        jnp.dot(h1.astype(w2_ref.dtype), w2_ref[...],
                preferred_element_type=jnp.float32) + b2_ref[...], 0.0)
    # flatten (already NCHW-flat) + fc
    out_ref[...] = (jnp.dot(h2.astype(wfc_ref.dtype), wfc_ref[...],
                            preferred_element_type=jnp.float32) + bfc_ref[...])


# ----------------------------------------------------------------------------
# Wrapper
# ----------------------------------------------------------------------------
def _pick_batch_tile(batch):
    """Large tiles amortize the ~600-cycle per-grid-step overhead; for B > 8 keep
    at least 2 grid steps so v7x's two TensorCores both get work. Cap at 512
    (all buffers still far inside the 32 MiB scoped-VMEM default)."""
    if batch <= 8:
        return batch                       # block == full batch dim (valid layout)
    tb = ((((batch + 1) // 2) + 7) // 8) * 8   # ceil(ceil(B/2) / 8) * 8
    return min(tb, 512)


def _const_spec(shape):
    """Weight/bias blocks never change across grid steps: single-buffer them."""
    return pl.BlockSpec(shape, lambda i: (0,) * len(shape),
                        pipeline_mode=pl.Buffered(1))


def finetuner_forward_padded(x_nchw, prepared):
    """Returns lane-dense padded logits (B, NCP); padded columns are zero."""
    w1_m, b1_m, w2_m, b2_m, wfc_m, bfc_m = prepared
    B = x_nchw.shape[0]
    ncp = wfc_m.shape[1]

    # NCHW flatten is a plain reshape (exactly torch's x.view(B, -1)).
    x_flat = x_nchw.reshape(B, K1).astype(w1_m.dtype)

    tb = _pick_batch_tile(B)
    grid = (pl.cdiv(B, tb),)

    flops = 2 * B * (K1 * K2P + K2P * K3P + K3P * ncp)
    weight_bytes = 4 * (K1 * K2P + K2P + K2P * K3P + K3P + K3P * ncp + ncp)
    bytes_accessed = int(B * K1 * x_flat.dtype.itemsize + B * ncp * 4 + weight_bytes)

    return pl.pallas_call(
        fused_finetuner_kernel,
        out_shape=jax.ShapeDtypeStruct((B, ncp), jnp.float32),
        grid_spec=pltpu.PrefetchScalarGridSpec(
            num_scalar_prefetch=0,
            grid=grid,
            in_specs=[
                pl.BlockSpec((tb, K1), lambda i: (i, 0)),
                _const_spec((K1, K2P)),
                _const_spec((1, K2P)),
                _const_spec((K2P, K3P)),
                _const_spec((1, K3P)),
                _const_spec((K3P, ncp)),
                _const_spec((1, ncp)),
            ],
            out_specs=pl.BlockSpec((tb, ncp), lambda i: (i, 0)),
        ),
        compiler_params=pltpu.CompilerParams(
            dimension_semantics=("parallel",)),   # batch axis: no carry; v7x 2 TCs
        cost_estimate=pl.CostEstimate(flops=flops, transcendentals=0,
                                      bytes_accessed=bytes_accessed),
    )(x_flat, w1_m, b1_m, w2_m, b2_m, wfc_m, bfc_m)


@functools.partial(jax.jit, static_argnames=("num_classes",))
def finetuner_forward(x_nchw, prepared, *, num_classes):
    # Downstream consumers that can mask/ignore the zero padded columns should
    # take finetuner_forward_padded() directly and skip this extra slice pass.
    return finetuner_forward_padded(x_nchw, prepared)[:, :num_classes]


# ----------------------------------------------------------------------------
# Pure-JAX reference (matches the PyTorch forward, eval mode)
# ----------------------------------------------------------------------------
def ref_forward(x_nchw, params):
    w1, b1, w2, b2, wfc, bfc = params
    dn = ('NCHW', 'OIHW', 'NCHW')
    h = lax.conv_general_dilated(x_nchw, w1, (1, 1), ((1, 1), (1, 1)),
                                 dimension_numbers=dn) + b1[None, :, None, None]
    h = jnp.maximum(h, 0.0)
    h = lax.conv_general_dilated(h, w2, (1, 1), ((1, 1), (1, 1)),
                                 dimension_numbers=dn) + b2[None, :, None, None]
    h = jnp.maximum(h, 0.0)
    h = h.reshape(h.shape[0], -1)
    return h @ wfc.T + bfc


if __name__ == "__main__":
    num_classes = 10
    key = jax.random.PRNGKey(0)
    ks = jax.random.split(key, 7)

    scale = 0.1
    w1 = scale * jax.random.normal(ks[1], (C_MID, C_IN, 3, 3), jnp.float32)
    b1 = scale * jax.random.normal(ks[2], (C_MID,), jnp.float32)
    w2 = scale * jax.random.normal(ks[3], (C_OUT, C_MID, 3, 3), jnp.float32)
    b2 = scale * jax.random.normal(ks[4], (C_OUT,), jnp.float32)
    wfc = scale * jax.random.normal(ks[5], (num_classes, C_OUT * H * W), jnp.float32)
    bfc = scale * jax.random.normal(ks[6], (num_classes,), jnp.float32)
    params = (w1, b1, w2, b2, wfc, bfc)

    # One-time weight reformatting (hoisted out of the hot path).
    prepared = jax.tree_util.tree_map(
        jax.block_until_ready, prepare_finetuner_params(params))

    ok = True
    # Small-batch case from the spec, plus a multi-grid-step case that exercises
    # the megacore-friendly tiling and a partial final block.
    for B in (2, 50):
        # Encoder output features (B, 64, 3, 3), NCHW as in PyTorch.
        x = jax.random.normal(jax.random.fold_in(ks[0], B),
                              (B, C_IN, H, W), jnp.float32)
        out = jax.block_until_ready(
            finetuner_forward(x, prepared, num_classes=num_classes))
        ref = ref_forward(x, params)
        ok &= out.shape == (B, num_classes)
        ok &= bool(jnp.allclose(out, ref, atol=1e-4, rtol=1e-4))

    assert ok, "Pallas result mismatch vs reference"
    print("KERNEL_OK")
</pallas_src>

<mosaic_0001>
module attributes {stable_mosaic.version = 11 : i64} {
  func.func @fused_finetuner_kernel(%arg0: i32, %arg1: memref<2x576xf32, #tpu.memory_space<vmem>>, %arg2: memref<576x384xf32, #tpu.memory_space<vmem>>, %arg3: memref<1x384xf32, #tpu.memory_space<vmem>>, %arg4: memref<384x256xf32, #tpu.memory_space<vmem>>, %arg5: memref<1x256xf32, #tpu.memory_space<vmem>>, %arg6: memref<256x128xf32, #tpu.memory_space<vmem>>, %arg7: memref<1x128xf32, #tpu.memory_space<vmem>>, %arg8: memref<2x128xf32, #tpu.memory_space<vmem>>) attributes {dimension_semantics = [#tpu.dimension_semantics<parallel>], iteration_bounds = array<i64: 1>, scalar_prefetch = 0 : i64, scratch_operands = 0 : i64, tpu.core_type = #tpu.core_type<tc>, window_params = [{transform_indices = @transform_0, window_bounds = array<i64: 2, 576>}, {pipeline_mode = #tpu.pipeline_mode<synchronous>, transform_indices = @transform_1, window_bounds = array<i64: 576, 384>}, {pipeline_mode = #tpu.pipeline_mode<synchronous>, transform_indices = @transform_2, window_bounds = array<i64: 1, 384>}, {pipeline_mode = #tpu.pipeline_mode<synchronous>, transform_indices = @transform_3, window_bounds = array<i64: 384, 256>}, {pipeline_mode = #tpu.pipeline_mode<synchronous>, transform_indices = @transform_4, window_bounds = array<i64: 1, 256>}, {pipeline_mode = #tpu.pipeline_mode<synchronous>, transform_indices = @transform_5, window_bounds = array<i64: 256, 128>}, {pipeline_mode = #tpu.pipeline_mode<synchronous>, transform_indices = @transform_6, window_bounds = array<i64: 1, 128>}, {transform_indices = @transform_7, window_bounds = array<i64: 2, 128>}]} {
    %c0 = arith.constant 0 : index
    %c0_0 = arith.constant 0 : index
    %0 = vector.load %arg1[%c0, %c0_0] : memref<2x576xf32, #tpu.memory_space<vmem>>, vector<2x576xf32>
    %c0_1 = arith.constant 0 : index
    %c0_2 = arith.constant 0 : index
    %1 = vector.load %arg2[%c0_1, %c0_2] : memref<576x384xf32, #tpu.memory_space<vmem>>, vector<576x384xf32>
    %cst = arith.constant dense<0.000000e+00> : vector<2x384xf32>
    %2 = tpu.matmul %0, %1, %cst {dimension_numbers = #tpu.dot_dimension_numbers<[1], [0], [0], [1], [0, 0, 1, 1], [], []>} : vector<2x576xf32>, vector<576x384xf32>, vector<2x384xf32> -> vector<2x384xf32>
    %c0_3 = arith.constant 0 : index
    %c0_4 = arith.constant 0 : index
    %3 = vector.load %arg3[%c0_3, %c0_4] : memref<1x384xf32, #tpu.memory_space<vmem>>, vector<1x384xf32>
    %4 = vector.broadcast %3 : vector<1x384xf32> to vector<2x384xf32>
    %5 = arith.addf %2, %4 : vector<2x384xf32>
    %cst_5 = arith.constant 0.000000e+00 : f32
    %6 = vector.broadcast %cst_5 : f32 to vector<2x384xf32>
    %7 = arith.maximumf %5, %6 : vector<2x384xf32>
    %c0_6 = arith.constant 0 : index
    %c0_7 = arith.constant 0 : index
    %8 = vector.load %arg4[%c0_6, %c0_7] : memref<384x256xf32, #tpu.memory_space<vmem>>, vector<384x256xf32>
    %cst_8 = arith.constant dense<0.000000e+00> : vector<2x256xf32>
    %9 = tpu.matmul %7, %8, %cst_8 {dimension_numbers = #tpu.dot_dimension_numbers<[1], [0], [0], [1], [0, 0, 1, 1], [], []>} : vector<2x384xf32>, vector<384x256xf32>, vector<2x256xf32> -> vector<2x256xf32>
    %c0_9 = arith.constant 0 : index
    %c0_10 = arith.constant 0 : index
    %10 = vector.load %arg5[%c0_9, %c0_10] : memref<1x256xf32, #tpu.memory_space<vmem>>, vector<1x256xf32>
    %11 = vector.broadcast %10 : vector<1x256xf32> to vector<2x256xf32>
    %12 = arith.addf %9, %11 : vector<2x256xf32>
    %cst_11 = arith.constant 0.000000e+00 : f32
    %13 = vector.broadcast %cst_11 : f32 to vector<2x256xf32>
    %14 = arith.maximumf %12, %13 : vector<2x256xf32>
    %c0_12 = arith.constant 0 : index
    %c0_13 = arith.constant 0 : index
    %15 = vector.load %arg6[%c0_12, %c0_13] : memref<256x128xf32, #tpu.memory_space<vmem>>, vector<256x128xf32>
    %cst_14 = arith.constant dense<0.000000e+00> : vector<2x128xf32>
    %16 = tpu.matmul %14, %15, %cst_14 {dimension_numbers = #tpu.dot_dimension_numbers<[1], [0], [0], [1], [0, 0, 1, 1], [], []>} : vector<2x256xf32>, vector<256x128xf32>, vector<2x128xf32> -> vector<2x128xf32>
    %c0_15 = arith.constant 0 : index
    %c0_16 = arith.constant 0 : index
    %17 = vector.load %arg7[%c0_15, %c0_16] : memref<1x128xf32, #tpu.memory_space<vmem>>, vector<1x128xf32>
    %18 = vector.broadcast %17 : vector<1x128xf32> to vector<2x128xf32>
    %19 = arith.addf %16, %18 : vector<2x128xf32>
    %c0_17 = arith.constant 0 : index
    %c0_18 = arith.constant 0 : index
    %20 = vector.load %arg8[%c0_17, %c0_18] : memref<2x128xf32, #tpu.memory_space<vmem>>, vector<2x128xf32>
    tpu.vector_store %arg8[%c0_17, %c0_18], %19 {strides = array<i32>} : memref<2x128xf32, #tpu.memory_space<vmem>>, vector<2x128xf32>,
    return
  }
  func.func @transform_0(%arg0: i32) -> (i32, i32) {
    %c0_i32 = arith.constant 0 : i32
    %c0_i32_0 = arith.constant 0 : i32
    return %arg0, %c0_i32 : i32, i32
  }
  func.func @transform_1(%arg0: i32) -> (i32, i32) {
    %c0_i32 = arith.constant 0 : i32
    %c0_i32_0 = arith.constant 0 : i32
    %c0_i32_1 = arith.constant 0 : i32
    return %c0_i32, %c0_i32_0 : i32, i32
  }
  func.func @transform_2(%arg0: i32) -> (i32, i32) {
    %c0_i32 = arith.constant 0 : i32
    %c0_i32_0 = arith.constant 0 : i32
    %c0_i32_1 = arith.constant 0 : i32
    return %c0_i32, %c0_i32_0 : i32, i32
  }
  func.func @transform_3(%arg0: i32) -> (i32, i32) {
    %c0_i32 = arith.constant 0 : i32
    %c0_i32_0 = arith.constant 0 : i32
    %c0_i32_1 = arith.constant 0 : i32
    return %c0_i32, %c0_i32_0 : i32, i32
  }
  func.func @transform_4(%arg0: i32) -> (i32, i32) {
    %c0_i32 = arith.constant 0 : i32
    %c0_i32_0 = arith.constant 0 : i32
    %c0_i32_1 = arith.constant 0 : i32
    return %c0_i32, %c0_i32_0 : i32, i32
  }
  func.func @transform_5(%arg0: i32) -> (i32, i32) {
    %c0_i32 = arith.constant 0 : i32
    %c0_i32_0 = arith.constant 0 : i32
    %c0_i32_1 = arith.constant 0 : i32
    return %c0_i32, %c0_i32_0 : i32, i32
  }
  func.func @transform_6(%arg0: i32) -> (i32, i32) {
    %c0_i32 = arith.constant 0 : i32
    %c0_i32_0 = arith.constant 0 : i32
    %c0_i32_1 = arith.constant 0 : i32
    return %c0_i32, %c0_i32_0 : i32, i32
  }
  func.func @transform_7(%arg0: i32) -> (i32, i32) {
    %c0_i32 = arith.constant 0 : i32
    %c0_i32_0 = arith.constant 0 : i32
    return %arg0, %c0_i32 : i32, i32
  }
}

</mosaic_0001>

<llo_original>
// kernel: finetuner_forward.1
$region0: #{finetuner_forward.1}
  #allocation0 [shape = 'u32[]', space=smem, size = 0x4, offset = 0x4, fixed_abs, tag = 'smem constant byte address 0x4 - core index']
  #allocation1 [shape = 'u32[72,128]{1,0:T(1,128)}', space=vmem, size = 0x9000, scoped, tag = 'internal scratch']
  %s0 = inlined_call_operand.vmem [shape: f32[2,576], index: 0, kind: input, shape index: {}]
  %s1 = inlined_call_operand.hbm [shape: f32[576,384], index: 1, kind: input, shape index: {}]
  %s2 = inlined_call_operand.vmem [shape: f32[1,384], index: 2, kind: input, shape index: {}]
  %s3 = inlined_call_operand.vmem [shape: f32[384,256], index: 3, kind: input, shape index: {}]
  %s4 = inlined_call_operand.vmem [shape: f32[1,256], index: 4, kind: input, shape index: {}]
  %s5 = inlined_call_operand.vmem [shape: f32[256,128], index: 5, kind: input, shape index: {}]
  %s6 = inlined_call_operand.vmem [shape: f32[1,128], index: 6, kind: input, shape index: {}]
  %s7 = inlined_call_operand.hbm [shape: f32[2,128], index: 7, kind: output, shape index: {}]
  %s8 = sld [smem:[#allocation0]]
  $region42: #{finetuner_forward.1} parent=0
    _
  %s10 = ssub.s32 1, %s8
  %s11 = scalar_select 0, %s10, %s8
  $region1: #{finetuner_forward.1} parent=0
    #allocation2 [shape = 'u8[884736]{0}', space=vmem, size = 0xd8000, scoped, tag = 'input window, operand 1, single buffered']
    #allocation3 [shape = 's32[1]{0}', space=sflag, size = 0x4, scoped, tag = 'scoped memory for finetuner_forward.1']
    #allocation4 [shape = 's32[1]{0}', space=sflag, size = 0x4, scoped, tag = 'scoped memory for finetuner_forward.1']
    #allocation5 [shape = 'u8[1024]{0}', space=vmem, size = 0x400, scoped, tag = 'output window, operand 0, single buffered']
    %12 = vsyncpa [#allocation3], 0
    %13 = vsyncpa [#allocation4], 0
    // Predicated region
    $region2: #{finetuner_forward.1} parent=1 // pred_check
      _
    $region3: #{finetuner_forward.1} parent=1 // pred_check_branch
      %15 = sbr.rel (0) target = $region5
    $region4: #{finetuner_forward.1} parent=1 // pred_region
      _
    $region5: #{finetuner_forward.1} parent=1 // pred_fallthru
      _
    // Predicated region
    $region6: #{finetuner_forward.1} parent=1 // pred_check
      _
    $region7: #{finetuner_forward.1} parent=1 // pred_check_branch
      %17 = sbr.rel (0) target = $region9
    $region8: #{finetuner_forward.1} parent=1 // pred_region
      %19 = vsyncadd [#allocation3], 0
      %s20 = sshll.u32 %s1, 4
      %s21 = int_to_ptr.hbm [resolvable:$true] %s20
      %s22 = sshll.u32 [#allocation2], 4
      %s23 = int_to_ptr.vmem [resolvable:$true] %s22
      %28 = dma.hbm_to_vmem [thread:$0]  %s21, 27648, %s23, [#allocation3], 384, 384, 24
    $region9: #{finetuner_forward.1} parent=1 // pred_fallthru
      _
    // Predicated region
    $region10: #{finetuner_forward.1} parent=1 // pred_check
      _
    $region11: #{finetuner_forward.1} parent=1 // pred_check_branch
      %30 = sbr.rel (0) target = $region13
    $region12: #{finetuner_forward.1} parent=1 // pred_region
      _
    $region13: #{finetuner_forward.1} parent=1 // pred_fallthru
      _
    // Predicated region
    $region14: #{finetuner_forward.1} parent=1 // pred_check
      _
    $region15: #{finetuner_forward.1} parent=1 // pred_check_branch
      %32 = sbr.rel (0) target = $region17
    $region16: #{finetuner_forward.1} parent=1 // pred_region
      _
    $region17: #{finetuner_forward.1} parent=1 // pred_fallthru
      _
    // Predicated region
    $region18: #{finetuner_forward.1} parent=1 // pred_check
      _
    $region19: #{finetuner_forward.1} parent=1 // pred_check_branch
      %34 = sbr.rel (0) target = $region21
    $region20: #{finetuner_forward.1} parent=1 // pred_region
      _
    $region21: #{finetuner_forward.1} parent=1 // pred_fallthru
      _
    // Predicated region
    $region22: #{finetuner_forward.1} parent=1 // pred_check
      _
    $region23: #{finetuner_forward.1} parent=1 // pred_check_branch
      %36 = sbr.rel (0) target = $region25
    $region24: #{finetuner_forward.1} parent=1 // pred_region
      _
    $region25: #{finetuner_forward.1} parent=1 // pred_fallthru
      _
    // Predicated region
    $region26: #{finetuner_forward.1} parent=1 // pred_check
      _
    $region27: #{finetuner_forward.1} parent=1 // pred_check_branch
      %38 = sbr.rel (0) target = $region29
    $region28: #{finetuner_forward.1} parent=1 // pred_region
      _
    $region29: #{finetuner_forward.1} parent=1 // pred_fallthru
      _
    // Predicated region
    $region30: #{finetuner_forward.1} parent=1 // pred_check
      _
    $region31: #{finetuner_forward.1} parent=1 // pred_check_branch
      %40 = sbr.rel (0) target = $region33
    $region32: #{finetuner_forward.1} parent=1 // pred_region
      %42 = dma.done [#allocation3], 27648
    $region33: #{finetuner_forward.1} parent=1 // pred_fallthru
      _
    %v43 = vld [vmem:[%s0] sm:$0xff]
    %v44 = vld [vmem:[%s0 + $0x8] sm:$0x3]
    %v45 = vld [vmem:[#allocation2] sm:$0xff]
    %v46 = vld [vmem:[#allocation2 + $0x8] sm:$0xff]
    %v47 = vld [vmem:[#allocation2 + $0x10] sm:$0xff]
    %v48 = vld [vmem:[#allocation2 + $0x18] sm:$0xff]
    %v49 = vld [vmem:[#allocation2 + $0x20] sm:$0xff]
    %v50 = vld [vmem:[#allocation2 + $0x28] sm:$0xff]
    %v51 = vld [vmem:[#allocation2 + $0x30] sm:$0xff]
    %v52 = vld [vmem:[#allocation2 + $0x38] sm:$0xff]
    %v53 = vld [vmem:[#allocation2 + $0x40] sm:$0xff]
    %v54 = vld [vmem:[#allocation2 + $0x48] sm:$0xff]
    %v55 = vld [vmem:[#allocation2 + $0x50] sm:$0xff]
    %v56 = vld [vmem:[#allocation2 + $0x58] sm:$0xff]
    %v57 = vld [vmem:[#allocation2 + $0x60] sm:$0xff]
    %v58 = vld [vmem:[#allocation2 + $0x68] sm:$0xff]
    %v59 = vld [vmem:[#allocation2 + $0x70] sm:$0xff]
    %v60 = vld [vmem:[#allocation2 + $0x78] sm:$0xff]
    %v61 = vld [vmem:[#allocation2 + $0x80] sm:$0xff]
    %v62 = vld [vmem:[#allocation2 + $0x88] sm:$0xff]
    %v63 = vld [vmem:[#allocation2 + $0x90] sm:$0xff]
    %v64 = vld [vmem:[#allocation2 + $0x98] sm:$0xff]
    %v65 = vld [vmem:[#allocation2 + $0xa0] sm:$0xff]
    %v66 = vld [vmem:[#allocation2 + $0xa8] sm:$0xff]
    %v67 = vld [vmem:[#allocation2 + $0xb0] sm:$0xff]
    %v68 = vld [vmem:[#allocation2 + $0xb8] sm:$0xff]
    %v69 = vld [vmem:[#allocation2 + $0xc0] sm:$0xff]
    %v70 = vld [vmem:[#allocation2 + $0xc8] sm:$0xff]
    %v71 = vld [vmem:[#allocation2 + $0xd0] sm:$0xff]
    %v72 = vld [vmem:[#allocation2 + $0xd8] sm:$0xff]
    %v73 = vld [vmem:[#allocation2 + $0xe0] sm:$0xff]
    %v74 = vld [vmem:[#allocation2 + $0xe8] sm:$0xff]
    %v75 = vld [vmem:[#allocation2 + $0xf0] sm:$0xff]
    %v76 = vld [vmem:[#allocation2 + $0xf8] sm:$0xff]
    %v77 = vld [vmem:[#allocation2 + $0x100] sm:$0xff]
    %v78 = vld [vmem:[#allocation2 + $0x108] sm:$0xff]
    %v79 = vld [vmem:[#allocation2 + $0x110] sm:$0xff]
    %v80 = vld [vmem:[#allocation2 + $0x118] sm:$0xff]
    %v81 = vld [vmem:[#allocation2 + $0x120] sm:$0xff]
    %v82 = vld [vmem:[#allocation2 + $0x128] sm:$0xff]
    %v83 = vld [vmem:[#allocation2 + $0x130] sm:$0xff]
    %v84 = vld [vmem:[#allocation2 + $0x138] sm:$0xff]
    %v85 = vld [vmem:[#allocation2 + $0x140] sm:$0xff]
    %v86 = vld [vmem:[#allocation2 + $0x148] sm:$0xff]
    %v87 = vld [vmem:[#allocation2 + $0x150] sm:$0xff]
    %v88 = vld [vmem:[#allocation2 + $0x158] sm:$0xff]
    %v89 = vld [vmem:[#allocation2 + $0x160] sm:$0xff]
    %v90 = vld [vmem:[#allocation2 + $0x168] sm:$0xff]
    %v91 = vld [vmem:[#allocation2 + $0x170] sm:$0xff]
    %v92 = vld [vmem:[#allocation2 + $0x178] sm:$0xff]
    %v93 = vld [vmem:[#allocation2 + $0x180] sm:$0xff]
    %v94 = vld [vmem:[#allocation2 + $0x188] sm:$0xff]
    %v95 = vld [vmem:[#allocation2 + $0x190] sm:$0xff]
    %v96 = vld [vmem:[#allocation2 + $0x198] sm:$0xff]
    %v97 = vld [vmem:[#allocation2 + $0x1a0] sm:$0xff]
    %v98 = vld [vmem:[#allocation2 + $0x1a8] sm:$0xff]
    %v99 = vld [vmem:[#allocation2 + $0x1b0] sm:$0xff]
    %v100 = vld [vmem:[#allocation2 + $0x1b8] sm:$0xff]
    %v101 = vld [vmem:[#allocation2 + $0x1c0] sm:$0xff]
    %v102 = vld [vmem:[#allocation2 + $0x1c8] sm:$0xff]
    %v103 = vld [vmem:[#allocation2 + $0x1d0] sm:$0xff]
    %v104 = vld [vmem:[#allocation2 + $0x1d8] sm:$0xff]
    %v105 = vld [vmem:[#allocation2 + $0x1e0] sm:$0xff]
    %v106 = vld [vmem:[#allocation2 + $0x1e8] sm:$0xff]
    %v107 = vld [vmem:[#allocation2 + $0x1f0] sm:$0xff]
    %v108 = vld [vmem:[#allocation2 + $0x1f8] sm:$0xff]
    %v109 = vld [vmem:[#allocation2 + $0x200] sm:$0xff]
    %v110 = vld [vmem:[#allocation2 + $0x208] sm:$0xff]
    %v111 = vld [vmem:[#allocation2 + $0x210] sm:$0xff]
    %v112 = vld [vmem:[#allocation2 + $0x218] sm:$0xff]
    %v113 = vld [vmem:[#allocation2 + $0x220] sm:$0xff]
    %v114 = vld [vmem:[#allocation2 + $0x228] sm:$0xff]
    %v115 = vld [vmem:[#allocation2 + $0x230] sm:$0xff]
    %v116 = vld [vmem:[#allocation2 + $0x238] sm:$0xff]
    %v117 = vld [vmem:[#allocation2 + $0x240] sm:$0xff]
    %v118 = vld [vmem:[#allocation2 + $0x248] sm:$0xff]
    %v119 = vld [vmem:[#allocation2 + $0x250] sm:$0xff]
    %v120 = vld [vmem:[#allocation2 + $0x258] sm:$0xff]
    %v121 = vld [vmem:[#allocation2 + $0x260] sm:$0xff]
    %v122 = vld [vmem:[#allocation2 + $0x268] sm:$0xff]
    %v123 = vld [vmem:[#allocation2 + $0x270] sm:$0xff]
    %v124 = vld [vmem:[#allocation2 + $0x278] sm:$0xff]
    %v125 = vld [vmem:[#allocation2 + $0x280] sm:$0xff]
    %v126 = vld [vmem:[#allocation2 + $0x288] sm:$0xff]
    %v127 = vld [vmem:[#allocation2 + $0x290] sm:$0xff]
    %v128 = vld [vmem:[#allocation2 + $0x298] sm:$0xff]
    %v129 = vld [vmem:[#allocation2 + $0x2a0] sm:$0xff]
    %v130 = vld [vmem:[#allocation2 + $0x2a8] sm:$0xff]
    %v131 = vld [vmem:[#allocation2 + $0x2b0] sm:$0xff]
    %v132 = vld [vmem:[#allocation2 + $0x2b8] sm:$0xff]
    %v133 = vld [vmem:[#allocation2 + $0x2c0] sm:$0xff]
    %v134 = vld [vmem:[#allocation2 + $0x2c8] sm:$0xff]
    %v135 = vld [vmem:[#allocation2 + $0x2d0] sm:$0xff]
    %v136 = vld [vmem:[#allocation2 + $0x2d8] sm:$0xff]
    %v137 = vld [vmem:[#allocation2 + $0x2e0] sm:$0xff]
    %v138 = vld [vmem:[#allocation2 + $0x2e8] sm:$0xff]
    %v139 = vld [vmem:[#allocation2 + $0x2f0] sm:$0xff]
    %v140 = vld [vmem:[#allocation2 + $0x2f8] sm:$0xff]
    %v141 = vld [vmem:[#allocation2 + $0x300] sm:$0xff]
    %v142 = vld [vmem:[#allocation2 + $0x308] sm:$0xff]
    %v143 = vld [vmem:[#allocation2 + $0x310] sm:$0xff]
    %v144 = vld [vmem:[#allocation2 + $0x318] sm:$0xff]
    %v145 = vld [vmem:[#allocation2 + $0x320] sm:$0xff]
    %v146 = vld [vmem:[#allocation2 + $0x328] sm:$0xff]
    %v147 = vld [vmem:[#allocation2 + $0x330] sm:$0xff]
    %v148 = vld [vmem:[#allocation2 + $0x338] sm:$0xff]
    %v149 = vld [vmem:[#allocation2 + $0x340] sm:$0xff]
    %v150 = vld [vmem:[#allocation2 + $0x348] sm:$0xff]
    %v151 = vld [vmem:[#allocation2 + $0x350] sm:$0xff]
    %v152 = vld [vmem:[#allocation2 + $0x358] sm:$0xff]
    %v153 = vld [vmem:[#allocation2 + $0x360] sm:$0xff]
    %v154 = vld [vmem:[#allocation2 + $0x368] sm:$0xff]
    %v155 = vld [vmem:[#allocation2 + $0x370] sm:$0xff]
    %v156 = vld [vmem:[#allocation2 + $0x378] sm:$0xff]
    %v157 = vld [vmem:[#allocation2 + $0x380] sm:$0xff]
    %v158 = vld [vmem:[#allocation2 + $0x388] sm:$0xff]
    %v159 = vld [vmem:[#allocation2 + $0x390] sm:$0xff]
    %v160 = vld [vmem:[#allocation2 + $0x398] sm:$0xff]
    %v161 = vld [vmem:[#allocation2 + $0x3a0] sm:$0xff]
    %v162 = vld [vmem:[#allocation2 + $0x3a8] sm:$0xff]
    %v163 = vld [vmem:[#allocation2 + $0x3b0] sm:$0xff]
    %v164 = vld [vmem:[#allocation2 + $0x3b8] sm:$0xff]
    %v165 = vld [vmem:[#allocation2 + $0x3c0] sm:$0xff]
    %v166 = vld [vmem:[#allocation2 + $0x3c8] sm:$0xff]
    %v167 = vld [vmem:[#allocation2 + $0x3d0] sm:$0xff]
    %v168 = vld [vmem:[#allocation2 + $0x3d8] sm:$0xff]
    %v169 = vld [vmem:[#allocation2 + $0x3e0] sm:$0xff]
    %v170 = vld [vmem:[#allocation2 + $0x3e8] sm:$0xff]
    %v171 = vld [vmem:[#allocation2 + $0x3f0] sm:$0xff]
    %v172 = vld [vmem:[#allocation2 + $0x3f8] sm:$0xff]
    %v173 = vld [vmem:[#allocation2 + $0x400] sm:$0xff]
    %v174 = vld [vmem:[#allocation2 + $0x408] sm:$0xff]
    %v175 = vld [vmem:[#allocation2 + $0x410] sm:$0xff]
    %v176 = vld [vmem:[#allocation2 + $0x418] sm:$0xff]
    %v177 = vld [vmem:[#allocation2 + $0x420] sm:$0xff]
    %v178 = vld [vmem:[#allocation2 + $0x428] sm:$0xff]
    %v179 = vld [vmem:[#allocation2 + $0x430] sm:$0xff]
    %v180 = vld [vmem:[#allocation2 + $0x438] sm:$0xff]
    %v181 = vld [vmem:[#allocation2 + $0x440] sm:$0xff]
    %v182 = vld [vmem:[#allocation2 + $0x448] sm:$0xff]
    %v183 = vld [vmem:[#allocation2 + $0x450] sm:$0xff]
    %v184 = vld [vmem:[#allocation2 + $0x458] sm:$0xff]
    %v185 = vld [vmem:[#allocation2 + $0x460] sm:$0xff]
    %v186 = vld [vmem:[#allocation2 + $0x468] sm:$0xff]
    %v187 = vld [vmem:[#allocation2 + $0x470] sm:$0xff]
    %v188 = vld [vmem:[#allocation2 + $0x478] sm:$0xff]
    %v189 = vld [vmem:[#allocation2 + $0x480] sm:$0xff]
    %v190 = vld [vmem:[#allocation2 + $0x488] sm:$0xff]
    %v191 = vld [vmem:[#allocation2 + $0x490] sm:$0xff]
    %v192 = vld [vmem:[#allocation2 + $0x498] sm:$0xff]
    %v193 = vld [vmem:[#allocation2 + $0x4a0] sm:$0xff]
    %v194 = vld [vmem:[#allocation2 + $0x4a8] sm:$0xff]
    %v195 = vld [vmem:[#allocation2 + $0x4b0] sm:$0xff]
    %v196 = vld [vmem:[#allocation2 + $0x4b8] sm:$0xff]
    %v197 = vld [vmem:[#allocation2 + $0x4c0] sm:$0xff]
    %v198 = vld [vmem:[#allocation2 + $0x4c8] sm:$0xff]
    %v199 = vld [vmem:[#allocation2 + $0x4d0] sm:$0xff]
    %v200 = vld [vmem:[#allocation2 + $0x4d8] sm:$0xff]
    %v201 = vld [vmem:[#allocation2 + $0x4e0] sm:$0xff]
    %v202 = vld [vmem:[#allocation2 + $0x4e8] sm:$0xff]
    %v203 = vld [vmem:[#allocation2 + $0x4f0] sm:$0xff]
    %v204 = vld [vmem:[#allocation2 + $0x4f8] sm:$0xff]
    %v205 = vld [vmem:[#allocation2 + $0x500] sm:$0xff]
    %v206 = vld [vmem:[#allocation2 + $0x508] sm:$0xff]
    %v207 = vld [vmem:[#allocation2 + $0x510] sm:$0xff]
    %v208 = vld [vmem:[#allocation2 + $0x518] sm:$0xff]
    %v209 = vld [vmem:[#allocation2 + $0x520] sm:$0xff]
    %v210 = vld [vmem:[#allocation2 + $0x528] sm:$0xff]
    %v211 = vld [vmem:[#allocation2 + $0x530] sm:$0xff]
    %v212 = vld [vmem:[#allocation2 + $0x538] sm:$0xff]
    %v213 = vld [vmem:[#allocation2 + $0x540] sm:$0xff]
    %v214 = vld [vmem:[#allocation2 + $0x548] sm:$0xff]
    %v215 = vld [vmem:[#allocation2 + $0x550] sm:$0xff]
    %v216 = vld [vmem:[#allocation2 + $0x558] sm:$0xff]
    %v217 = vld [vmem:[#allocation2 + $0x560] sm:$0xff]
    %v218 = vld [vmem:[#allocation2 + $0x568] sm:$0xff]
    %v219 = vld [vmem:[#allocation2 + $0x570] sm:$0xff]
    %v220 = vld [vmem:[#allocation2 + $0x578] sm:$0xff]
    %v221 = vld [vmem:[#allocation2 + $0x580] sm:$0xff]
    %v222 = vld [vmem:[#allocation2 + $0x588] sm:$0xff]
    %v223 = vld [vmem:[#allocation2 + $0x590] sm:$0xff]
    %v224 = vld [vmem:[#allocation2 + $0x598] sm:$0xff]
    %v225 = vld [vmem:[#allocation2 + $0x5a0] sm:$0xff]
    %v226 = vld [vmem:[#allocation2 + $0x5a8] sm:$0xff]
    %v227 = vld [vmem:[#allocation2 + $0x5b0] sm:$0xff]
    %v228 = vld [vmem:[#allocation2 + $0x5b8] sm:$0xff]
    %v229 = vld [vmem:[#allocation2 + $0x5c0] sm:$0xff]
    %v230 = vld [vmem:[#allocation2 + $0x5c8] sm:$0xff]
    %v231 = vld [vmem:[#allocation2 + $0x5d0] sm:$0xff]
    %v232 = vld [vmem:[#allocation2 + $0x5d8] sm:$0xff]
    %v233 = vld [vmem:[#allocation2 + $0x5e0] sm:$0xff]
    %v234 = vld [vmem:[#allocation2 + $0x5e8] sm:$0xff]
    %v235 = vld [vmem:[#allocation2 + $0x5f0] sm:$0xff]
    %v236 = vld [vmem:[#allocation2 + $0x5f8] sm:$0xff]
    %v237 = vld [vmem:[#allocation2 + $0x600] sm:$0xff]
    %v238 = vld [vmem:[#allocation2 + $0x608] sm:$0xff]
    %v239 = vld [vmem:[#allocation2 + $0x610] sm:$0xff]
    %v240 = vld [vmem:[#allocation2 + $0x618] sm:$0xff]
    %v241 = vld [vmem:[#allocation2 + $0x620] sm:$0xff]
    %v242 = vld [vmem:[#allocation2 + $0x628] sm:$0xff]
    %v243 = vld [vmem:[#allocation2 + $0x630] sm:$0xff]
    %v244 = vld [vmem:[#allocation2 + $0x638] sm:$0xff]
    %v245 = vld [vmem:[#allocation2 + $0x640] sm:$0xff]
    %v246 = vld [vmem:[#allocation2 + $0x648] sm:$0xff]
    %v247 = vld [vmem:[#allocation2 + $0x650] sm:$0xff]
    %v248 = vld [vmem:[#allocation2 + $0x658] sm:$0xff]
    %v249 = vld [vmem:[#allocation2 + $0x660] sm:$0xff]
    %v250 = vld [vmem:[#allocation2 + $0x668] sm:$0xff]
    %v251 = vld [vmem:[#allocation2 + $0x670] sm:$0xff]
    %v252 = vld [vmem:[#allocation2 + $0x678] sm:$0xff]
    %v253 = vld [vmem:[#allocation2 + $0x680] sm:$0xff]
    %v254 = vld [vmem:[#allocation2 + $0x688] sm:$0xff]
    %v255 = vld [vmem:[#allocation2 + $0x690] sm:$0xff]
    %v256 = vld [vmem:[#allocation2 + $0x698] sm:$0xff]
    %v257 = vld [vmem:[#allocation2 + $0x6a0] sm:$0xff]
    %v258 = vld [vmem:[#allocation2 + $0x6a8] sm:$0xff]
    %v259 = vld [vmem:[#allocation2 + $0x6b0] sm:$0xff]
    %v260 = vld [vmem:[#allocation2 + $0x6b8] sm:$0xff]
    %v261 = vld [vmem:[%s2] sm:$0x7]
    %v263 = vperm.slane %v261, 0
    %v264 = vperm.slane %v261, 1
    %v265 = vperm.slane %v261, 2
    %271 = vst [vmem:[#allocation1] ss:$4 sm:$0xff] %v43
    %s272 = scalar_lea.vmem [#allocation1], 32
    %273 = vst [vmem:[%s272] ss:$4 sm:$0xff] %v44
    %v274 = vld.sshfl [vmem:[#allocation1] sm:$0xff pattern:$0x73625140]
    %v275 = vld.sshfl [vmem:[#allocation1 + $0x8] sm:$0xff pattern:$0x73625140]
    %v276 = vld.sshfl [vmem:[#allocation1 + $0x10] sm:$0xff pattern:$0x73625140]
    %v277 = vld.sshfl [vmem:[#allocation1 + $0x18] sm:$0xff pattern:$0x73625140]
    %v278 = vld.sshfl [vmem:[#allocation1 + $0x20] sm:$0xff pattern:$0x73625140]
    %vm283 = vcmask 523264
    %v284 = vsel %vm283, %v278, 0
    %286 = vmatpush.msra.mxu0 %v90
    %287 = vmatpush.msra.mxu0 %v87
    %288 = vmatpush.msra.mxu0 %v84
    %289 = vmatpush.msra.mxu0 %v81
    %290 = vmatpush.msra.mxu0 %v78
    %291 = vmatpush.msra.mxu0 %v75
    %292 = vmatpush.msra.mxu0 %v72
    %293 = vmatpush.msra.mxu0 %v69
    %294 = vmatpush.msra.mxu0 %v66
    %295 = vmatpush.msra.mxu0 %v63
    %296 = vmatpush.msra.mxu0 %v60
    %297 = vmatpush.msra.mxu0 %v57
    %298 = vmatpush.msra.mxu0 %v54
    %299 = vmatpush.msra.mxu0 %v51
    %300 = vmatpush.msra.mxu0 %v48
    %301 = vmatpush.msra.mxu0 %v45
    %302 = vmatmul.f32.gmra.mxu0 %v274
    %v303 = vpop.f32.mrf.mxu0
    %v304 = vadd.f32 %v263, %v303
    %305 = vdwg.mxu0
    %306 = vmatpush.msra.mxu0 %v138
    %307 = vmatpush.msra.mxu0 %v135
    %308 = vmatpush.msra.mxu0 %v132
    %309 = vmatpush.msra.mxu0 %v129
    %310 = vmatpush.msra.mxu0 %v126
    %311 = vmatpush.msra.mxu0 %v123
    %312 = vmatpush.msra.mxu0 %v120
    %313 = vmatpush.msra.mxu0 %v117
    %314 = vmatpush.msra.mxu0 %v114
    %315 = vmatpush.msra.mxu0 %v111
    %316 = vmatpush.msra.mxu0 %v108
    %317 = vmatpush.msra.mxu0 %v105
    %318 = vmatpush.msra.mxu0 %v102
    %319 = vmatpush.msra.mxu0 %v99
    %320 = vmatpush.msra.mxu0 %v96
    %321 = vmatpush.msra.mxu0 %v93
    %322 = vmatmul.f32.gmra.mxu0 %v275
    %v323 = vpop.f32.mrf.mxu0
    %v324 = vadd.f32 %v304, %v323
    %325 = vdwg.mxu0
    %326 = vmatpush.msra.mxu0 %v186
    %327 = vmatpush.msra.mxu0 %v183
    %328 = vmatpush.msra.mxu0 %v180
    %329 = vmatpush.msra.mxu0 %v177
    %330 = vmatpush.msra.mxu0 %v174
    %331 = vmatpush.msra.mxu0 %v171
    %332 = vmatpush.msra.mxu0 %v168
    %333 = vmatpush.msra.mxu0 %v165
    %334 = vmatpush.msra.mxu0 %v162
    %335 = vmatpush.msra.mxu0 %v159
    %336 = vmatpush.msra.mxu0 %v156
    %337 = vmatpush.msra.mxu0 %v153
    %338 = vmatpush.msra.mxu0 %v150
    %339 = vmatpush.msra.mxu0 %v147
    %340 = vmatpush.msra.mxu0 %v144
    %341 = vmatpush.msra.mxu0 %v141
    %342 = vmatmul.f32.gmra.mxu0 %v276
    %v343 = vpop.f32.mrf.mxu0
    %v344 = vadd.f32 %v324, %v343
    %345 = vdwg.mxu0
    %346 = vmatpush.msra.mxu0 %v234
    %347 = vmatpush.msra.mxu0 %v231
    %348 = vmatpush.msra.mxu0 %v228
    %349 = vmatpush.msra.mxu0 %v225
    %350 = vmatpush.msra.mxu0 %v222
    %351 = vmatpush.msra.mxu0 %v219
    %352 = vmatpush.msra.mxu0 %v216
    %353 = vmatpush.msra.mxu0 %v213
    %354 = vmatpush.msra.mxu0 %v210
    %355 = vmatpush.msra.mxu0 %v207
    %356 = vmatpush.msra.mxu0 %v204
    %357 = vmatpush.msra.mxu0 %v201
    %358 = vmatpush.msra.mxu0 %v198
    %359 = vmatpush.msra.mxu0 %v195
    %360 = vmatpush.msra.mxu0 %v192
    %361 = vmatpush.msra.mxu0 %v189
    %362 = vmatmul.f32.gmra.mxu0 %v277
    %v363 = vpop.f32.mrf.mxu0
    %v364 = vadd.f32 %v344, %v363
    %365 = vdwg.mxu0
    %366 = vmatpush.msra.mxu0 0.0
    %367 = vmatpush.msra.mxu0 0.0
    %368 = vmatpush.msra.mxu0 0.0
    %369 = vmatpush.msra.mxu0 0.0
    %370 = vmatpush.msra.mxu0 0.0
    %371 = vmatpush.msra.mxu0 0.0
    %372 = vmatpush.msra.mxu0 0.0
    %373 = vmatpush.msra.mxu0 0.0
    %374 = vmatpush.msra.mxu0 %v258
    %375 = vmatpush.msra.mxu0 %v255
    %376 = vmatpush.msra.mxu0 %v252
    %377 = vmatpush.msra.mxu0 %v249
    %378 = vmatpush.msra.mxu0 %v246
    %379 = vmatpush.msra.mxu0 %v243
    %380 = vmatpush.msra.mxu0 %v240
    %381 = vmatpush.msra.mxu0 %v237
    %382 = vmatmul.f32.gmra.mxu0 %v284
    %v383 = vpop.f32.mrf.mxu0
    %v384 = vadd.f32 %v364, %v383
    %385 = vdwg.mxu0
    %386 = vmatpush.msra.mxu0 %v91
    %387 = vmatpush.msra.mxu0 %v88
    %388 = vmatpush.msra.mxu0 %v85
    %389 = vmatpush.msra.mxu0 %v82
    %390 = vmatpush.msra.mxu0 %v79
    %391 = vmatpush.msra.mxu0 %v76
    %392 = vmatpush.msra.mxu0 %v73
    %393 = vmatpush.msra.mxu0 %v70
    %394 = vmatpush.msra.mxu0 %v67
    %395 = vmatpush.msra.mxu0 %v64
    %396 = vmatpush.msra.mxu0 %v61
    %397 = vmatpush.msra.mxu0 %v58
    %398 = vmatpush.msra.mxu0 %v55
    %399 = vmatpush.msra.mxu0 %v52
    %400 = vmatpush.msra.mxu0 %v49
    %401 = vmatpush.msra.mxu0 %v46
    %402 = vmatmul.f32.gmra.mxu0 %v274
    %v403 = vpop.f32.mrf.mxu0
    %v404 = vadd.f32 %v264, %v403
    %405 = vdwg.mxu0
    %406 = vmatpush.msra.mxu0 %v139
    %407 = vmatpush.msra.mxu0 %v136
    %408 = vmatpush.msra.mxu0 %v133
    %409 = vmatpush.msra.mxu0 %v130
    %410 = vmatpush.msra.mxu0 %v127
    %411 = vmatpush.msra.mxu0 %v124
    %412 = vmatpush.msra.mxu0 %v121
    %413 = vmatpush.msra.mxu0 %v118
    %414 = vmatpush.msra.mxu0 %v115
    %415 = vmatpush.msra.mxu0 %v112
    %416 = vmatpush.msra.mxu0 %v109
    %417 = vmatpush.msra.mxu0 %v106
    %418 = vmatpush.msra.mxu0 %v103
    %419 = vmatpush.msra.mxu0 %v100
    %420 = vmatpush.msra.mxu0 %v97
    %421 = vmatpush.msra.mxu0 %v94
    %422 = vmatmul.f32.gmra.mxu0 %v275
    %v423 = vpop.f32.mrf.mxu0
    %v424 = vadd.f32 %v404, %v423
    %425 = vdwg.mxu0
    %426 = vmatpush.msra.mxu0 %v187
    %427 = vmatpush.msra.mxu0 %v184
    %428 = vmatpush.msra.mxu0 %v181
    %429 = vmatpush.msra.mxu0 %v178
    %430 = vmatpush.msra.mxu0 %v175
    %431 = vmatpush.msra.mxu0 %v172
    %432 = vmatpush.msra.mxu0 %v169
    %433 = vmatpush.msra.mxu0 %v166
    %434 = vmatpush.msra.mxu0 %v163
    %435 = vmatpush.msra.mxu0 %v160
    %436 = vmatpush.msra.mxu0 %v157
    %437 = vmatpush.msra.mxu0 %v154
    %438 = vmatpush.msra.mxu0 %v151
    %439 = vmatpush.msra.mxu0 %v148
    %440 = vmatpush.msra.mxu0 %v145
    %441 = vmatpush.msra.mxu0 %v142
    %442 = vmatmul.f32.gmra.mxu0 %v276
    %v443 = vpop.f32.mrf.mxu0
    %v444 = vadd.f32 %v424, %v443
    %445 = vdwg.mxu0
    %446 = vmatpush.msra.mxu0 %v235
    %447 = vmatpush.msra.mxu0 %v232
    %448 = vmatpush.msra.mxu0 %v229
    %449 = vmatpush.msra.mxu0 %v226
    %450 = vmatpush.msra.mxu0 %v223
    %451 = vmatpush.msra.mxu0 %v220
    %452 = vmatpush.msra.mxu0 %v217
    %453 = vmatpush.msra.mxu0 %v214
    %454 = vmatpush.msra.mxu0 %v211
    %455 = vmatpush.msra.mxu0 %v208
    %456 = vmatpush.msra.mxu0 %v205
    %457 = vmatpush.msra.mxu0 %v202
    %458 = vmatpush.msra.mxu0 %v199
    %459 = vmatpush.msra.mxu0 %v196
    %460 = vmatpush.msra.mxu0 %v193
    %461 = vmatpush.msra.mxu0 %v190
    %462 = vmatmul.f32.gmra.mxu0 %v277
    %v463 = vpop.f32.mrf.mxu0
    %v464 = vadd.f32 %v444, %v463
    %465 = vdwg.mxu0
    %466 = vmatpush.msra.mxu0 0.0
    %467 = vmatpush.msra.mxu0 0.0
    %468 = vmatpush.msra.mxu0 0.0
    %469 = vmatpush.msra.mxu0 0.0
    %470 = vmatpush.msra.mxu0 0.0
    %471 = vmatpush.msra.mxu0 0.0
    %472 = vmatpush.msra.mxu0 0.0
    %473 = vmatpush.msra.mxu0 0.0
    %474 = vmatpush.msra.mxu0 %v259
    %475 = vmatpush.msra.mxu0 %v256
    %476 = vmatpush.msra.mxu0 %v253
    %477 = vmatpush.msra.mxu0 %v250
    %478 = vmatpush.msra.mxu0 %v247
    %479 = vmatpush.msra.mxu0 %v244
    %480 = vmatpush.msra.mxu0 %v241
    %481 = vmatpush.msra.mxu0 %v238
    %482 = vmatmul.f32.gmra.mxu0 %v284
    %v483 = vpop.f32.mrf.mxu0
    %v484 = vadd.f32 %v464, %v483
    %485 = vdwg.mxu0
    %486 = vmatpush.msra.mxu0 %v92
    %487 = vmatpush.msra.mxu0 %v89
    %488 = vmatpush.msra.mxu0 %v86
    %489 = vmatpush.msra.mxu0 %v83
    %490 = vmatpush.msra.mxu0 %v80
    %491 = vmatpush.msra.mxu0 %v77
    %492 = vmatpush.msra.mxu0 %v74
    %493 = vmatpush.msra.mxu0 %v71
    %494 = vmatpush.msra.mxu0 %v68
    %495 = vmatpush.msra.mxu0 %v65
    %496 = vmatpush.msra.mxu0 %v62
    %497 = vmatpush.msra.mxu0 %v59
    %498 = vmatpush.msra.mxu0 %v56
    %499 = vmatpush.msra.mxu0 %v53
    %500 = vmatpush.msra.mxu0 %v50
    %501 = vmatpush.msra.mxu0 %v47
    %502 = vmatmul.f32.gmra.mxu0 %v274
    %v503 = vpop.f32.mrf.mxu0
    %v504 = vadd.f32 %v265, %v503
    %505 = vdwg.mxu0
    %506 = vmatpush.msra.mxu0 %v140
    %507 = vmatpush.msra.mxu0 %v137
    %508 = vmatpush.msra.mxu0 %v134
    %509 = vmatpush.msra.mxu0 %v131
    %510 = vmatpush.msra.mxu0 %v128
    %511 = vmatpush.msra.mxu0 %v125
    %512 = vmatpush.msra.mxu0 %v122
    %513 = vmatpush.msra.mxu0 %v119
    %514 = vmatpush.msra.mxu0 %v116
    %515 = vmatpush.msra.mxu0 %v113
    %516 = vmatpush.msra.mxu0 %v110
    %517 = vmatpush.msra.mxu0 %v107
    %518 = vmatpush.msra.mxu0 %v104
    %519 = vmatpush.msra.mxu0 %v101
    %520 = vmatpush.msra.mxu0 %v98
    %521 = vmatpush.msra.mxu0 %v95
    %522 = vmatmul.f32.gmra.mxu0 %v275
    %v523 = vpop.f32.mrf.mxu0
    %v524 = vadd.f32 %v504, %v523
    %525 = vdwg.mxu0
    %526 = vmatpush.msra.mxu0 %v188
    %527 = vmatpush.msra.mxu0 %v185
    %528 = vmatpush.msra.mxu0 %v182
    %529 = vmatpush.msra.mxu0 %v179
    %530 = vmatpush.msra.mxu0 %v176
    %531 = vmatpush.msra.mxu0 %v173
    %532 = vmatpush.msra.mxu0 %v170
    %533 = vmatpush.msra.mxu0 %v167
    %534 = vmatpush.msra.mxu0 %v164
    %535 = vmatpush.msra.mxu0 %v161
    %536 = vmatpush.msra.mxu0 %v158
    %537 = vmatpush.msra.mxu0 %v155
    %538 = vmatpush.msra.mxu0 %v152
    %539 = vmatpush.msra.mxu0 %v149
    %540 = vmatpush.msra.mxu0 %v146
    %541 = vmatpush.msra.mxu0 %v143
    %542 = vmatmul.f32.gmra.mxu0 %v276
    %v543 = vpop.f32.mrf.mxu0
    %v544 = vadd.f32 %v524, %v543
    %545 = vdwg.mxu0
    %546 = vmatpush.msra.mxu0 %v236
    %547 = vmatpush.msra.mxu0 %v233
    %548 = vmatpush.msra.mxu0 %v230
    %549 = vmatpush.msra.mxu0 %v227
    %550 = vmatpush.msra.mxu0 %v224
    %551 = vmatpush.msra.mxu0 %v221
    %552 = vmatpush.msra.mxu0 %v218
    %553 = vmatpush.msra.mxu0 %v215
    %554 = vmatpush.msra.mxu0 %v212
    %555 = vmatpush.msra.mxu0 %v209
    %556 = vmatpush.msra.mxu0 %v206
    %557 = vmatpush.msra.mxu0 %v203
    %558 = vmatpush.msra.mxu0 %v200
    %559 = vmatpush.msra.mxu0 %v197
    %560 = vmatpush.msra.mxu0 %v194
    %561 = vmatpush.msra.mxu0 %v191
    %562 = vmatmul.f32.gmra.mxu0 %v277
    %v563 = vpop.f32.mrf.mxu0
    %v564 = vadd.f32 %v544, %v563
    %565 = vdwg.mxu0
    %566 = vmatpush.msra.mxu0 0.0
    %567 = vmatpush.msra.mxu0 0.0
    %568 = vmatpush.msra.mxu0 0.0
    %569 = vmatpush.msra.mxu0 0.0
    %570 = vmatpush.msra.mxu0 0.0
    %571 = vmatpush.msra.mxu0 0.0
    %572 = vmatpush.msra.mxu0 0.0
    %573 = vmatpush.msra.mxu0 0.0
    %574 = vmatpush.msra.mxu0 %v260
    %575 = vmatpush.msra.mxu0 %v257
    %576 = vmatpush.msra.mxu0 %v254
    %577 = vmatpush.msra.mxu0 %v251
    %578 = vmatpush.msra.mxu0 %v248
    %579 = vmatpush.msra.mxu0 %v245
    %580 = vmatpush.msra.mxu0 %v242
    %581 = vmatpush.msra.mxu0 %v239
    %582 = vmatmul.f32.gmra.mxu0 %v284
    %v583 = vpop.f32.mrf.mxu0
    %v584 = vadd.f32 %v564, %v583
    %585 = vdwg.mxu0
    %v586 = vmax.f32 %v384, 0.0
    %v587 = vmax.f32 %v484, 0.0
    %v588 = vmax.f32 %v584, 0.0
    %v589 = vld [vmem:[%s3] sm:$0xff]
    %v590 = vld [vmem:[%s3 + $0x8] sm:$0xff]
    %v591 = vld [vmem:[%s3 + $0x10] sm:$0xff]
    %v592 = vld [vmem:[%s3 + $0x18] sm:$0xff]
    %v593 = vld [vmem:[%s3 + $0x20] sm:$0xff]
    %v594 = vld [vmem:[%s3 + $0x28] sm:$0xff]
    %v595 = vld [vmem:[%s3 + $0x30] sm:$0xff]
    %v596 = vld [vmem:[%s3 + $0x38] sm:$0xff]
    %v597 = vld [vmem:[%s3 + $0x40] sm:$0xff]
    %v598 = vld [vmem:[%s3 + $0x48] sm:$0xff]
    %v599 = vld [vmem:[%s3 + $0x50] sm:$0xff]
    %v600 = vld [vmem:[%s3 + $0x58] sm:$0xff]
    %v601 = vld [vmem:[%s3 + $0x60] sm:$0xff]
    %v602 = vld [vmem:[%s3 + $0x68] sm:$0xff]
    %v603 = vld [vmem:[%s3 + $0x70] sm:$0xff]
    %v604 = vld [vmem:[%s3 + $0x78] sm:$0xff]
    %v605 = vld [vmem:[%s3 + $0x80] sm:$0xff]
    %v606 = vld [vmem:[%s3 + $0x88] sm:$0xff]
    %v607 = vld [vmem:[%s3 + $0x90] sm:$0xff]
    %v608 = vld [vmem:[%s3 + $0x98] sm:$0xff]
    %v609 = vld [vmem:[%s3 + $0xa0] sm:$0xff]
    %v610 = vld [vmem:[%s3 + $0xa8] sm:$0xff]
    %v611 = vld [vmem:[%s3 + $0xb0] sm:$0xff]
    %v612 = vld [vmem:[%s3 + $0xb8] sm:$0xff]
    %v613 = vld [vmem:[%s3 + $0xc0] sm:$0xff]
    %v614 = vld [vmem:[%s3 + $0xc8] sm:$0xff]
    %v615 = vld [vmem:[%s3 + $0xd0] sm:$0xff]
    %v616 = vld [vmem:[%s3 + $0xd8] sm:$0xff]
    %v617 = vld [vmem:[%s3 + $0xe0] sm:$0xff]
    %v618 = vld [vmem:[%s3 + $0xe8] sm:$0xff]
    %v619 = vld [vmem:[%s3 + $0xf0] sm:$0xff]
    %v620 = vld [vmem:[%s3 + $0xf8] sm:$0xff]
    %v621 = vld [vmem:[%s3 + $0x100] sm:$0xff]
    %v622 = vld [vmem:[%s3 + $0x108] sm:$0xff]
    %v623 = vld [vmem:[%s3 + $0x110] sm:$0xff]
    %v624 = vld [vmem:[%s3 + $0x118] sm:$0xff]
    %v625 = vld [vmem:[%s3 + $0x120] sm:$0xff]
    %v626 = vld [vmem:[%s3 + $0x128] sm:$0xff]
    %v627 = vld [vmem:[%s3 + $0x130] sm:$0xff]
    %v628 = vld [vmem:[%s3 + $0x138] sm:$0xff]
    %v629 = vld [vmem:[%s3 + $0x140] sm:$0xff]
    %v630 = vld [vmem:[%s3 + $0x148] sm:$0xff]
    %v631 = vld [vmem:[%s3 + $0x150] sm:$0xff]
    %v632 = vld [vmem:[%s3 + $0x158] sm:$0xff]
    %v633 = vld [vmem:[%s3 + $0x160] sm:$0xff]
    %v634 = vld [vmem:[%s3 + $0x168] sm:$0xff]
    %v635 = vld [vmem:[%s3 + $0x170] sm:$0xff]
    %v636 = vld [vmem:[%s3 + $0x178] sm:$0xff]
    %v637 = vld [vmem:[%s3 + $0x180] sm:$0xff]
    %v638 = vld [vmem:[%s3 + $0x188] sm:$0xff]
    %v639 = vld [vmem:[%s3 + $0x190] sm:$0xff]
    %v640 = vld [vmem:[%s3 + $0x198] sm:$0xff]
    %v641 = vld [vmem:[%s3 + $0x1a0] sm:$0xff]
    %v642 = vld [vmem:[%s3 + $0x1a8] sm:$0xff]
    %v643 = vld [vmem:[%s3 + $0x1b0] sm:$0xff]
    %v644 = vld [vmem:[%s3 + $0x1b8] sm:$0xff]
    %v645 = vld [vmem:[%s3 + $0x1c0] sm:$0xff]
    %v646 = vld [vmem:[%s3 + $0x1c8] sm:$0xff]
    %v647 = vld [vmem:[%s3 + $0x1d0] sm:$0xff]
    %v648 = vld [vmem:[%s3 + $0x1d8] sm:$0xff]
    %v649 = vld [vmem:[%s3 + $0x1e0] sm:$0xff]
    %v650 = vld [vmem:[%s3 + $0x1e8] sm:$0xff]
    %v651 = vld [vmem:[%s3 + $0x1f0] sm:$0xff]
    %v652 = vld [vmem:[%s3 + $0x1f8] sm:$0xff]
    %v653 = vld [vmem:[%s3 + $0x200] sm:$0xff]
    %v654 = vld [vmem:[%s3 + $0x208] sm:$0xff]
    %v655 = vld [vmem:[%s3 + $0x210] sm:$0xff]
    %v656 = vld [vmem:[%s3 + $0x218] sm:$0xff]
    %v657 = vld [vmem:[%s3 + $0x220] sm:$0xff]
    %v658 = vld [vmem:[%s3 + $0x228] sm:$0xff]
    %v659 = vld [vmem:[%s3 + $0x230] sm:$0xff]
    %v660 = vld [vmem:[%s3 + $0x238] sm:$0xff]
    %v661 = vld [vmem:[%s3 + $0x240] sm:$0xff]
    %v662 = vld [vmem:[%s3 + $0x248] sm:$0xff]
    %v663 = vld [vmem:[%s3 + $0x250] sm:$0xff]
    %v664 = vld [vmem:[%s3 + $0x258] sm:$0xff]
    %v665 = vld [vmem:[%s3 + $0x260] sm:$0xff]
    %v666 = vld [vmem:[%s3 + $0x268] sm:$0xff]
    %v667 = vld [vmem:[%s3 + $0x270] sm:$0xff]
    %v668 = vld [vmem:[%s3 + $0x278] sm:$0xff]
    %v669 = vld [vmem:[%s3 + $0x280] sm:$0xff]
    %v670 = vld [vmem:[%s3 + $0x288] sm:$0xff]
    %v671 = vld [vmem:[%s3 + $0x290] sm:$0xff]
    %v672 = vld [vmem:[%s3 + $0x298] sm:$0xff]
    %v673 = vld [vmem:[%s3 + $0x2a0] sm:$0xff]
    %v674 = vld [vmem:[%s3 + $0x2a8] sm:$0xff]
    %v675 = vld [vmem:[%s3 + $0x2b0] sm:$0xff]
    %v676 = vld [vmem:[%s3 + $0x2b8] sm:$0xff]
    %v677 = vld [vmem:[%s3 + $0x2c0] sm:$0xff]
    %v678 = vld [vmem:[%s3 + $0x2c8] sm:$0xff]
    %v679 = vld [vmem:[%s3 + $0x2d0] sm:$0xff]
    %v680 = vld [vmem:[%s3 + $0x2d8] sm:$0xff]
    %v681 = vld [vmem:[%s3 + $0x2e0] sm:$0xff]
    %v682 = vld [vmem:[%s3 + $0x2e8] sm:$0xff]
    %v683 = vld [vmem:[%s3 + $0x2f0] sm:$0xff]
    %v684 = vld [vmem:[%s3 + $0x2f8] sm:$0xff]
    %v685 = vld [vmem:[%s4] sm:$0x3]
    %v687 = vperm.slane %v685, 0
    %v688 = vperm.slane %v685, 1
    %691 = vmatpush.msra.mxu0 %v619
    %692 = vmatpush.msra.mxu0 %v617
    %693 = vmatpush.msra.mxu0 %v615
    %694 = vmatpush.msra.mxu0 %v613
    %695 = vmatpush.msra.mxu0 %v611
    %696 = vmatpush.msra.mxu0 %v609
    %697 = vmatpush.msra.mxu0 %v607
    %698 = vmatpush.msra.mxu0 %v605
    %699 = vmatpush.msra.mxu0 %v603
    %700 = vmatpush.msra.mxu0 %v601
    %701 = vmatpush.msra.mxu0 %v599
    %702 = vmatpush.msra.mxu0 %v597
    %703 = vmatpush.msra.mxu0 %v595
    %704 = vmatpush.msra.mxu0 %v593
    %705 = vmatpush.msra.mxu0 %v591
    %706 = vmatpush.msra.mxu0 %v589
    %707 = vmatmul.f32.gmra.mxu0 %v586
    %v708 = vpop.f32.mrf.mxu0
    %v709 = vadd.f32 %v687, %v708
    %710 = vdwg.mxu0
    %711 = vmatpush.msra.mxu0 %v651
    %712 = vmatpush.msra.mxu0 %v649
    %713 = vmatpush.msra.mxu0 %v647
    %714 = vmatpush.msra.mxu0 %v645
    %715 = vmatpush.msra.mxu0 %v643
    %716 = vmatpush.msra.mxu0 %v641
    %717 = vmatpush.msra.mxu0 %v639
    %718 = vmatpush.msra.mxu0 %v637
    %719 = vmatpush.msra.mxu0 %v635
    %720 = vmatpush.msra.mxu0 %v633
    %721 = vmatpush.msra.mxu0 %v631
    %722 = vmatpush.msra.mxu0 %v629
    %723 = vmatpush.msra.mxu0 %v627
    %724 = vmatpush.msra.mxu0 %v625
    %725 = vmatpush.msra.mxu0 %v623
    %726 = vmatpush.msra.mxu0 %v621
    %727 = vmatmul.f32.gmra.mxu0 %v587
    %v728 = vpop.f32.mrf.mxu0
    %v729 = vadd.f32 %v709, %v728
    %730 = vdwg.mxu0
    %731 = vmatpush.msra.mxu0 %v683
    %732 = vmatpush.msra.mxu0 %v681
    %733 = vmatpush.msra.mxu0 %v679
    %734 = vmatpush.msra.mxu0 %v677
    %735 = vmatpush.msra.mxu0 %v675
    %736 = vmatpush.msra.mxu0 %v673
    %737 = vmatpush.msra.mxu0 %v671
    %738 = vmatpush.msra.mxu0 %v669
    %739 = vmatpush.msra.mxu0 %v667
    %740 = vmatpush.msra.mxu0 %v665
    %741 = vmatpush.msra.mxu0 %v663
    %742 = vmatpush.msra.mxu0 %v661
    %743 = vmatpush.msra.mxu0 %v659
    %744 = vmatpush.msra.mxu0 %v657
    %745 = vmatpush.msra.mxu0 %v655
    %746 = vmatpush.msra.mxu0 %v653
    %747 = vmatmul.f32.gmra.mxu0 %v588
    %v748 = vpop.f32.mrf.mxu0
    %v749 = vadd.f32 %v729, %v748
    %750 = vdwg.mxu0
    %751 = vmatpush.msra.mxu0 %v620
    %752 = vmatpush.msra.mxu0 %v618
    %753 = vmatpush.msra.mxu0 %v616
    %754 = vmatpush.msra.mxu0 %v614
    %755 = vmatpush.msra.mxu0 %v612
    %756 = vmatpush.msra.mxu0 %v610
    %757 = vmatpush.msra.mxu0 %v608
    %758 = vmatpush.msra.mxu0 %v606
    %759 = vmatpush.msra.mxu0 %v604
    %760 = vmatpush.msra.mxu0 %v602
    %761 = vmatpush.msra.mxu0 %v600
    %762 = vmatpush.msra.mxu0 %v598
    %763 = vmatpush.msra.mxu0 %v596
    %764 = vmatpush.msra.mxu0 %v594
    %765 = vmatpush.msra.mxu0 %v592
    %766 = vmatpush.msra.mxu0 %v590
    %767 = vmatmul.f32.gmra.mxu0 %v586
    %v768 = vpop.f32.mrf.mxu0
    %v769 = vadd.f32 %v688, %v768
    %770 = vdwg.mxu0
    %771 = vmatpush.msra.mxu0 %v652
    %772 = vmatpush.msra.mxu0 %v650
    %773 = vmatpush.msra.mxu0 %v648
    %774 = vmatpush.msra.mxu0 %v646
    %775 = vmatpush.msra.mxu0 %v644
    %776 = vmatpush.msra.mxu0 %v642
    %777 = vmatpush.msra.mxu0 %v640
    %778 = vmatpush.msra.mxu0 %v638
    %779 = vmatpush.msra.mxu0 %v636
    %780 = vmatpush.msra.mxu0 %v634
    %781 = vmatpush.msra.mxu0 %v632
    %782 = vmatpush.msra.mxu0 %v630
    %783 = vmatpush.msra.mxu0 %v628
    %784 = vmatpush.msra.mxu0 %v626
    %785 = vmatpush.msra.mxu0 %v624
    %786 = vmatpush.msra.mxu0 %v622
    %787 = vmatmul.f32.gmra.mxu0 %v587
    %v788 = vpop.f32.mrf.mxu0
    %v789 = vadd.f32 %v769, %v788
    %790 = vdwg.mxu0
    %791 = vmatpush.msra.mxu0 %v684
    %792 = vmatpush.msra.mxu0 %v682
    %793 = vmatpush.msra.mxu0 %v680
    %794 = vmatpush.msra.mxu0 %v678
    %795 = vmatpush.msra.mxu0 %v676
    %796 = vmatpush.msra.mxu0 %v674
    %797 = vmatpush.msra.mxu0 %v672
    %798 = vmatpush.msra.mxu0 %v670
    %799 = vmatpush.msra.mxu0 %v668
    %800 = vmatpush.msra.mxu0 %v666
    %801 = vmatpush.msra.mxu0 %v664
    %802 = vmatpush.msra.mxu0 %v662
    %803 = vmatpush.msra.mxu0 %v660
    %804 = vmatpush.msra.mxu0 %v658
    %805 = vmatpush.msra.mxu0 %v656
    %806 = vmatpush.msra.mxu0 %v654
    %807 = vmatmul.f32.gmra.mxu0 %v588
    %v808 = vpop.f32.mrf.mxu0
    %v809 = vadd.f32 %v789, %v808
    %810 = vdwg.mxu0
    %v811 = vmax.f32 %v749, 0.0
    %v812 = vmax.f32 %v809, 0.0
    %v813 = vld [vmem:[%s5] sm:$0xff]
    %v814 = vld [vmem:[%s5 + $0x8] sm:$0xff]
    %v815 = vld [vmem:[%s5 + $0x10] sm:$0xff]
    %v816 = vld [vmem:[%s5 + $0x18] sm:$0xff]
    %v817 = vld [vmem:[%s5 + $0x20] sm:$0xff]
    %v818 = vld [vmem:[%s5 + $0x28] sm:$0xff]
    %v819 = vld [vmem:[%s5 + $0x30] sm:$0xff]
    %v820 = vld [vmem:[%s5 + $0x38] sm:$0xff]
    %v821 = vld [vmem:[%s5 + $0x40] sm:$0xff]
    %v822 = vld [vmem:[%s5 + $0x48] sm:$0xff]
    %v823 = vld [vmem:[%s5 + $0x50] sm:$0xff]
    %v824 = vld [vmem:[%s5 + $0x58] sm:$0xff]
    %v825 = vld [vmem:[%s5 + $0x60] sm:$0xff]
    %v826 = vld [vmem:[%s5 + $0x68] sm:$0xff]
    %v827 = vld [vmem:[%s5 + $0x70] sm:$0xff]
    %v828 = vld [vmem:[%s5 + $0x78] sm:$0xff]
    %v829 = vld [vmem:[%s5 + $0x80] sm:$0xff]
    %v830 = vld [vmem:[%s5 + $0x88] sm:$0xff]
    %v831 = vld [vmem:[%s5 + $0x90] sm:$0xff]
    %v832 = vld [vmem:[%s5 + $0x98] sm:$0xff]
    %v833 = vld [vmem:[%s5 + $0xa0] sm:$0xff]
    %v834 = vld [vmem:[%s5 + $0xa8] sm:$0xff]
    %v835 = vld [vmem:[%s5 + $0xb0] sm:$0xff]
    %v836 = vld [vmem:[%s5 + $0xb8] sm:$0xff]
    %v837 = vld [vmem:[%s5 + $0xc0] sm:$0xff]
    %v838 = vld [vmem:[%s5 + $0xc8] sm:$0xff]
    %v839 = vld [vmem:[%s5 + $0xd0] sm:$0xff]
    %v840 = vld [vmem:[%s5 + $0xd8] sm:$0xff]
    %v841 = vld [vmem:[%s5 + $0xe0] sm:$0xff]
    %v842 = vld [vmem:[%s5 + $0xe8] sm:$0xff]
    %v843 = vld [vmem:[%s5 + $0xf0] sm:$0xff]
    %v844 = vld [vmem:[%s5 + $0xf8] sm:$0xff]
    %v845 = vld [vmem:[%s6] sm:$0x1]
    %v847 = vperm.slane %v845, 0
    %849 = vmatpush.msra.mxu0 %v828
    %850 = vmatpush.msra.mxu0 %v827
    %851 = vmatpush.msra.mxu0 %v826
    %852 = vmatpush.msra.mxu0 %v825
    %853 = vmatpush.msra.mxu0 %v824
    %854 = vmatpush.msra.mxu0 %v823
    %855 = vmatpush.msra.mxu0 %v822
    %856 = vmatpush.msra.mxu0 %v821
    %857 = vmatpush.msra.mxu0 %v820
    %858 = vmatpush.msra.mxu0 %v819
    %859 = vmatpush.msra.mxu0 %v818
    %860 = vmatpush.msra.mxu0 %v817
    %861 = vmatpush.msra.mxu0 %v816
    %862 = vmatpush.msra.mxu0 %v815
    %863 = vmatpush.msra.mxu0 %v814
    %864 = vmatpush.msra.mxu0 %v813
    %865 = vmatmul.f32.gmra.mxu0 %v811
    %v866 = vpop.f32.mrf.mxu0
    %v867 = vadd.f32 %v847, %v866
    %868 = vdwg.mxu0
    %869 = vmatpush.msra.mxu0 %v844
    %870 = vmatpush.msra.mxu0 %v843
    %871 = vmatpush.msra.mxu0 %v842
    %872 = vmatpush.msra.mxu0 %v841
    %873 = vmatpush.msra.mxu0 %v840
    %874 = vmatpush.msra.mxu0 %v839
    %875 = vmatpush.msra.mxu0 %v838
    %876 = vmatpush.msra.mxu0 %v837
    %877 = vmatpush.msra.mxu0 %v836
    %878 = vmatpush.msra.mxu0 %v835
    %879 = vmatpush.msra.mxu0 %v834
    %880 = vmatpush.msra.mxu0 %v833
    %881 = vmatpush.msra.mxu0 %v832
    %882 = vmatpush.msra.mxu0 %v831
    %883 = vmatpush.msra.mxu0 %v830
    %884 = vmatpush.msra.mxu0 %v829
    %885 = vmatmul.f32.gmra.mxu0 %v812
    %v886 = vpop.f32.mrf.mxu0
    %v887 = vadd.f32 %v867, %v886
    %888 = vdwg.mxu0
    %889 = vst [vmem:[#allocation5] sm:$0x3] %v887
    // Predicated region
    $region34: #{finetuner_forward.1} parent=1 // pred_check
      _
    $region35: #{finetuner_forward.1} parent=1 // pred_check_branch
      %891 = sbr.rel (0) target = $region37
    $region36: #{finetuner_forward.1} parent=1 // pred_region
      %893 = vsyncadd [#allocation4], 0
      %s895 = sshll.u32 [#allocation5], 4
      %s896 = int_to_ptr.vmem [resolvable:$true] %s895
      %s897 = sshll.u32 %s7, 4
      %s898 = int_to_ptr.hbm [resolvable:$true] %s897
      %900 = dma.vmem_to_hbm [thread:$0]  %s896, 32, %s898, [#allocation4]
    $region37: #{finetuner_forward.1} parent=1 // pred_fallthru
      _
    // Predicated region
    $region38: #{finetuner_forward.1} parent=1 // pred_check
      _
    $region39: #{finetuner_forward.1} parent=1 // pred_check_branch
      %902 = sbr.rel (0) target = $region41
    $region40: #{finetuner_forward.1} parent=1 // pred_region
      %904 = dma.done [#allocation4], 32
    $region41: #{finetuner_forward.1} parent=1 // pred_fallthru
      _
    %905 = vsyncpa [#allocation3], 1
    %906 = vsyncpa [#allocation4], 1

</llo_original>
